<compile_context>
chip_gen: v5e
topology: v5e:2x2
jax: 0.10.0
libtpu: 0.0.40
codegen_flags: <defaults>
</compile_context>

<pallas_src>
import jax
import jax.numpy as jnp
from jax.experimental import pallas as pl
from jax.experimental.pallas import tpu as pltpu


def dueling_q_kernel(
    x_ref,                 # (TB, S)   compute dtype
    w1_ref, b1_ref,        # (S, H) compute dtype, (1, H) f32
    wh1_ref, bh1_ref,      # (H, 2H) fused value||adv L1, (1, 2H) f32
    wh2_ref, bh2_ref,      # (2H, 1+A) block-diag fused L2, (1, 1+A) f32
    q_ref,                 # out: (TB, A) f32
):
    cdt = w1_ref.dtype                       # MXU operand dtype (f32 or bf16)
    x = x_ref[...]

    # --- shared feature layer: ReLU(x @ W1 + b1)  (bias/ReLU in f32) ---
    feat = jnp.dot(x, w1_ref[...], preferred_element_type=jnp.float32)
    feat = jnp.maximum(feat + b1_ref[...], 0.0)

    # --- fused head L1: one dot produces [v_h || a_h] : (TB, 2H) ---
    h = jnp.dot(feat.astype(cdt), wh1_ref[...], preferred_element_type=jnp.float32)
    h = jnp.maximum(h + bh1_ref[...], 0.0)

    # --- fused head L2 (block-diagonal): one dot produces [V || A] : (TB, 1+A) ---
    va = jnp.dot(h.astype(cdt), wh2_ref[...], preferred_element_type=jnp.float32)
    va = va + bh2_ref[...]

    act = q_ref.shape[-1]
    v = va[:, 0:1]                           # (TB, 1)
    a = va[:, 1:1 + act]                     # (TB, A)

    # --- dueling combine: Q = V + A - mean_A  (all f32 on the VPU/XLU) ---
    q_ref[...] = (v + a - jnp.mean(a, axis=-1, keepdims=True)).astype(q_ref.dtype)


def dueling_q_forward(x, params, *, block_b=None, compute_dtype=jnp.float32):
    """x: (B, state_size). params: dict of weights/biases. Returns (B, action_size) f32."""
    B, S = x.shape
    H = params["w1"].shape[1]
    A = params["wa2"].shape[1]

    # Batch tile: whole batch for small B, else 512-row tiles (f32-sublane aligned).
    if block_b is None:
        block_b = B if B <= 1024 else 512
    if block_b != B:
        assert block_b % 8 == 0, "batch tile must be a multiple of 8 sublanes"

    cast = lambda w: w.astype(compute_dtype)
    x_c = x.astype(compute_dtype)
    w1 = cast(params["w1"])
    b1 = params["b1"].astype(jnp.float32)

    # Fused head L1: concat value/advantage first layers -> (H, 2H).
    wh1 = jnp.concatenate([cast(params["wv1"]), cast(params["wa1"])], axis=1)
    bh1 = jnp.concatenate([params["bv1"], params["ba1"]], axis=1).astype(jnp.float32)

    # Fused head L2: block-diagonal [[wv2, 0], [0, wa2]] -> (2H, 1+A).
    z_va = jnp.zeros((H, A), compute_dtype)
    z_av = jnp.zeros((H, 1), compute_dtype)
    wh2 = jnp.concatenate(
        [jnp.concatenate([cast(params["wv2"]), z_va], axis=1),
         jnp.concatenate([z_av, cast(params["wa2"])], axis=1)],
        axis=0)
    bh2 = jnp.concatenate([params["bv2"], params["ba2"]], axis=1).astype(jnp.float32)

    args = (x_c, w1, b1, wh1, bh1, wh2, bh2)

    grid = (pl.cdiv(B, block_b),)
    # x / q tiled along batch; weights use a constant index_map so the same
    # block is revisited every step (stays resident in VMEM, no re-DMA).
    weight_spec = lambda w: pl.BlockSpec(w.shape, lambda i: (0, 0))
    in_specs = [
        pl.BlockSpec((block_b, S), lambda i: (i, 0)),   # x
        weight_spec(w1), weight_spec(b1),
        weight_spec(wh1), weight_spec(bh1),
        weight_spec(wh2), weight_spec(bh2),
    ]
    out_specs = pl.BlockSpec((block_b, A), lambda i: (i, 0))

    return pl.pallas_call(
        dueling_q_kernel,
        out_shape=jax.ShapeDtypeStruct((B, A), jnp.float32),
        grid=grid,
        in_specs=in_specs,
        out_specs=out_specs,
        compiler_params=pltpu.CompilerParams(
            dimension_semantics=("parallel",),   # shard batch tiles across TCs (v7x)
        ),
    )(*args)


def init_params(key, state_size, action_size, hidden_size):
    ks = jax.random.split(key, 5)

    def lin(k, fan_in, fan_out):
        # uniform(-1/sqrt(fan_in), 1/sqrt(fan_in)), same scheme as torch.nn.Linear
        bound = 1.0 / jnp.sqrt(float(fan_in))
        kw, kb = jax.random.split(k)
        w = jax.random.uniform(kw, (fan_in, fan_out), jnp.float32, -bound, bound)
        b = jax.random.uniform(kb, (1, fan_out), jnp.float32, -bound, bound)
        return w, b

    w1, b1 = lin(ks[0], state_size, hidden_size)
    wv1, bv1 = lin(ks[1], hidden_size, hidden_size)
    wv2, bv2 = lin(ks[2], hidden_size, 1)
    wa1, ba1 = lin(ks[3], hidden_size, hidden_size)
    wa2, ba2 = lin(ks[4], hidden_size, action_size)
    return dict(w1=w1, b1=b1, wv1=wv1, bv1=bv1, wv2=wv2, bv2=bv2,
                wa1=wa1, ba1=ba1, wa2=wa2, ba2=ba2)


def reference_forward(x, p):
    relu = lambda t: jnp.maximum(t, 0.0)
    feat = relu(x @ p["w1"] + p["b1"])
    v = relu(feat @ p["wv1"] + p["bv1"]) @ p["wv2"] + p["bv2"]
    a = relu(feat @ p["wa1"] + p["ba1"]) @ p["wa2"] + p["ba2"]
    return v + a - a.mean(axis=-1, keepdims=True)


if __name__ == "__main__":
    key = jax.random.PRNGKey(0)
    k_param, k_x = jax.random.split(key)

    state_size, action_size, hidden_size, batch = 16, 4, 32, 2
    params = init_params(k_param, state_size, action_size, hidden_size)
    x = jax.random.normal(k_x, (batch, state_size), jnp.float32)

    # f32 compute for the small demo so the 1e-5 check holds; pass
    # compute_dtype=jnp.bfloat16 for large-batch inference on v6e/v7x.
    q = dueling_q_forward(x, params)
    q = jax.block_until_ready(q)

    q_ref = reference_forward(x, params)
    assert q.shape == (batch, action_size)
    assert jnp.allclose(q, q_ref, atol=1e-5, rtol=1e-5), "mismatch vs pure-JAX reference"
    print("KERNEL_OK")
</pallas_src>

<mosaic_0001>
module attributes {stable_mosaic.version = 11 : i64} {
  func.func @dueling_q_kernel(%arg0: i32, %arg1: memref<2x16xf32, #tpu.memory_space<vmem>>, %arg2: memref<16x32xf32, #tpu.memory_space<vmem>>, %arg3: memref<1x32xf32, #tpu.memory_space<vmem>>, %arg4: memref<32x64xf32, #tpu.memory_space<vmem>>, %arg5: memref<1x64xf32, #tpu.memory_space<vmem>>, %arg6: memref<64x5xf32, #tpu.memory_space<vmem>>, %arg7: memref<1x5xf32, #tpu.memory_space<vmem>>, %arg8: memref<2x4xf32, #tpu.memory_space<vmem>>) attributes {dimension_semantics = [#tpu.dimension_semantics<parallel>], iteration_bounds = array<i64: 1>, scalar_prefetch = 0 : i64, scratch_operands = 0 : i64, tpu.core_type = #tpu.core_type<tc>, window_params = [{transform_indices = @transform_0, window_bounds = array<i64: 2, 16>}, {pipeline_mode = #tpu.pipeline_mode<synchronous>, transform_indices = @transform_1, window_bounds = array<i64: 16, 32>}, {pipeline_mode = #tpu.pipeline_mode<synchronous>, transform_indices = @transform_2, window_bounds = array<i64: 1, 32>}, {pipeline_mode = #tpu.pipeline_mode<synchronous>, transform_indices = @transform_3, window_bounds = array<i64: 32, 64>}, {pipeline_mode = #tpu.pipeline_mode<synchronous>, transform_indices = @transform_4, window_bounds = array<i64: 1, 64>}, {pipeline_mode = #tpu.pipeline_mode<synchronous>, transform_indices = @transform_5, window_bounds = array<i64: 64, 5>}, {pipeline_mode = #tpu.pipeline_mode<synchronous>, transform_indices = @transform_6, window_bounds = array<i64: 1, 5>}, {transform_indices = @transform_7, window_bounds = array<i64: 2, 4>}]} {
    %c0 = arith.constant 0 : index
    %c0_0 = arith.constant 0 : index
    %0 = vector.load %arg1[%c0, %c0_0] : memref<2x16xf32, #tpu.memory_space<vmem>>, vector<2x16xf32>
    %c0_1 = arith.constant 0 : index
    %c0_2 = arith.constant 0 : index
    %1 = vector.load %arg2[%c0_1, %c0_2] : memref<16x32xf32, #tpu.memory_space<vmem>>, vector<16x32xf32>
    %cst = arith.constant dense<0.000000e+00> : vector<2x32xf32>
    %2 = tpu.matmul %0, %1, %cst {dimension_numbers = #tpu.dot_dimension_numbers<[1], [0], [0], [1], [0, 0, 1, 1], [], []>} : vector<2x16xf32>, vector<16x32xf32>, vector<2x32xf32> -> vector<2x32xf32>
    %c0_3 = arith.constant 0 : index
    %c0_4 = arith.constant 0 : index
    %3 = vector.load %arg3[%c0_3, %c0_4] : memref<1x32xf32, #tpu.memory_space<vmem>>, vector<1x32xf32>
    %4 = vector.broadcast %3 : vector<1x32xf32> to vector<2x32xf32>
    %5 = arith.addf %2, %4 : vector<2x32xf32>
    %cst_5 = arith.constant 0.000000e+00 : f32
    %6 = vector.broadcast %cst_5 : f32 to vector<2x32xf32>
    %7 = arith.maximumf %5, %6 : vector<2x32xf32>
    %c0_6 = arith.constant 0 : index
    %c0_7 = arith.constant 0 : index
    %8 = vector.load %arg4[%c0_6, %c0_7] : memref<32x64xf32, #tpu.memory_space<vmem>>, vector<32x64xf32>
    %cst_8 = arith.constant dense<0.000000e+00> : vector<2x64xf32>
    %9 = tpu.matmul %7, %8, %cst_8 {dimension_numbers = #tpu.dot_dimension_numbers<[1], [0], [0], [1], [0, 0, 1, 1], [], []>} : vector<2x32xf32>, vector<32x64xf32>, vector<2x64xf32> -> vector<2x64xf32>
    %c0_9 = arith.constant 0 : index
    %c0_10 = arith.constant 0 : index
    %10 = vector.load %arg5[%c0_9, %c0_10] : memref<1x64xf32, #tpu.memory_space<vmem>>, vector<1x64xf32>
    %11 = vector.broadcast %10 : vector<1x64xf32> to vector<2x64xf32>
    %12 = arith.addf %9, %11 : vector<2x64xf32>
    %cst_11 = arith.constant 0.000000e+00 : f32
    %13 = vector.broadcast %cst_11 : f32 to vector<2x64xf32>
    %14 = arith.maximumf %12, %13 : vector<2x64xf32>
    %c0_12 = arith.constant 0 : index
    %c0_13 = arith.constant 0 : index
    %15 = vector.load %arg6[%c0_12, %c0_13] : memref<64x5xf32, #tpu.memory_space<vmem>>, vector<64x5xf32>
    %cst_14 = arith.constant dense<0.000000e+00> : vector<2x5xf32>
    %16 = tpu.matmul %14, %15, %cst_14 {dimension_numbers = #tpu.dot_dimension_numbers<[1], [0], [0], [1], [0, 0, 1, 1], [], []>} : vector<2x64xf32>, vector<64x5xf32>, vector<2x5xf32> -> vector<2x5xf32>
    %c0_15 = arith.constant 0 : index
    %c0_16 = arith.constant 0 : index
    %17 = vector.load %arg7[%c0_15, %c0_16] : memref<1x5xf32, #tpu.memory_space<vmem>>, vector<1x5xf32>
    %18 = vector.broadcast %17 : vector<1x5xf32> to vector<2x5xf32>
    %19 = arith.addf %16, %18 : vector<2x5xf32>
    %20 = vector.extract_strided_slice %19 {offsets = [0, 0], sizes = [2, 1], strides = [1, 1]} : vector<2x5xf32> to vector<2x1xf32>
    %21 = vector.extract_strided_slice %19 {offsets = [0, 1], sizes = [2, 4], strides = [1, 1]} : vector<2x5xf32> to vector<2x4xf32>
    %22 = vector.broadcast %20 : vector<2x1xf32> to vector<2x4xf32>
    %23 = arith.addf %22, %21 : vector<2x4xf32>
    %cst_17 = arith.constant dense<0.000000e+00> : vector<2xf32>
    %24 = vector.multi_reduction <add>, %21, %cst_17 [1] : vector<2x4xf32> to vector<2xf32>
    %25 = vector.shape_cast %24 : vector<2xf32> to vector<2x1xf32>
    %cst_18 = arith.constant 4.000000e+00 : f32
    %26 = vector.broadcast %cst_18 : f32 to vector<2x1xf32>
    %27 = arith.divf %25, %26 : vector<2x1xf32>
    %28 = vector.broadcast %27 : vector<2x1xf32> to vector<2x4xf32>
    %29 = arith.subf %23, %28 : vector<2x4xf32>
    %c0_19 = arith.constant 0 : index
    %c0_20 = arith.constant 0 : index
    %30 = vector.load %arg8[%c0_19, %c0_20] : memref<2x4xf32, #tpu.memory_space<vmem>>, vector<2x4xf32>
    tpu.vector_store %arg8[%c0_19, %c0_20], %29 {strides = array<i32>} : memref<2x4xf32, #tpu.memory_space<vmem>>, vector<2x4xf32>,
    return
  }
  func.func @transform_0(%arg0: i32) -> (i32, i32) {
    %c0_i32 = arith.constant 0 : i32
    %c0_i32_0 = arith.constant 0 : i32
    return %arg0, %c0_i32 : i32, i32
  }
  func.func @transform_1(%arg0: i32) -> (i32, i32) {
    %c0_i32 = arith.constant 0 : i32
    %c0_i32_0 = arith.constant 0 : i32
    %c0_i32_1 = arith.constant 0 : i32
    return %c0_i32, %c0_i32_0 : i32, i32
  }
  func.func @transform_2(%arg0: i32) -> (i32, i32) {
    %c0_i32 = arith.constant 0 : i32
    %c0_i32_0 = arith.constant 0 : i32
    %c0_i32_1 = arith.constant 0 : i32
    return %c0_i32, %c0_i32_0 : i32, i32
  }
  func.func @transform_3(%arg0: i32) -> (i32, i32) {
    %c0_i32 = arith.constant 0 : i32
    %c0_i32_0 = arith.constant 0 : i32
    %c0_i32_1 = arith.constant 0 : i32
    return %c0_i32, %c0_i32_0 : i32, i32
  }
  func.func @transform_4(%arg0: i32) -> (i32, i32) {
    %c0_i32 = arith.constant 0 : i32
    %c0_i32_0 = arith.constant 0 : i32
    %c0_i32_1 = arith.constant 0 : i32
    return %c0_i32, %c0_i32_0 : i32, i32
  }
  func.func @transform_5(%arg0: i32) -> (i32, i32) {
    %c0_i32 = arith.constant 0 : i32
    %c0_i32_0 = arith.constant 0 : i32
    %c0_i32_1 = arith.constant 0 : i32
    return %c0_i32, %c0_i32_0 : i32, i32
  }
  func.func @transform_6(%arg0: i32) -> (i32, i32) {
    %c0_i32 = arith.constant 0 : i32
    %c0_i32_0 = arith.constant 0 : i32
    %c0_i32_1 = arith.constant 0 : i32
    return %c0_i32, %c0_i32_0 : i32, i32
  }
  func.func @transform_7(%arg0: i32) -> (i32, i32) {
    %c0_i32 = arith.constant 0 : i32
    %c0_i32_0 = arith.constant 0 : i32
    return %arg0, %c0_i32 : i32, i32
  }
}

</mosaic_0001>

<llo_original>
// kernel: tpu_custom_call.1
$region0: #{tpu_custom_call.1}
  #allocation0 [shape = 'u32[]', space=smem, size = 0x4, offset = 0x4, fixed_abs, tag = 'smem constant byte address 0x4 - core index']
  #allocation1 [shape = 'u32[72,128]{1,0:T(1,128)}', space=vmem, size = 0x9000, scoped, tag = 'internal scratch']
  %s0 = inlined_call_operand.vmem [shape: f32[2,16], index: 0, kind: input, shape index: {}]
  %s1 = inlined_call_operand.vmem [shape: f32[16,32], index: 1, kind: input, shape index: {}]
  %s2 = inlined_call_operand.vmem [shape: f32[1,32], index: 2, kind: input, shape index: {}]
  %s3 = inlined_call_operand.vmem [shape: f32[32,64], index: 3, kind: input, shape index: {}]
  %s4 = inlined_call_operand.vmem [shape: f32[1,64], index: 4, kind: input, shape index: {}]
  %s5 = inlined_call_operand.vmem [shape: f32[64,5], index: 5, kind: input, shape index: {}]
  %s6 = inlined_call_operand.vmem [shape: f32[1,5], index: 6, kind: input, shape index: {}]
  %s7 = inlined_call_operand.hbm [shape: f32[2,4], index: 7, kind: output, shape index: {}]
  %s8 = sld [smem:[#allocation0]]
  $region38: #{tpu_custom_call.1} parent=0
    _
  %s10 = ssub.s32 1, %s8
  %s11 = scalar_select 0, %s10, %s8
  $region1: #{tpu_custom_call.1} parent=0
    #allocation2 [shape = 'u8[1024]{0}', space=vmem, size = 0x400, scoped, tag = 'output window, operand 0, single buffered']
    #allocation3 [shape = 's32[1]{0}', space=sflag, size = 0x4, scoped, tag = 'scoped memory for tpu_custom_call.1']
    %12 = vsyncpa [#allocation3], 0
    // Predicated region
    $region2: #{tpu_custom_call.1} parent=1 // pred_check
      _
    $region3: #{tpu_custom_call.1} parent=1 // pred_check_branch
      %14 = sbr.rel (0) target = $region5
    $region4: #{tpu_custom_call.1} parent=1 // pred_region
      _
    $region5: #{tpu_custom_call.1} parent=1 // pred_fallthru
      _
    // Predicated region
    $region6: #{tpu_custom_call.1} parent=1 // pred_check
      _
    $region7: #{tpu_custom_call.1} parent=1 // pred_check_branch
      %16 = sbr.rel (0) target = $region9
    $region8: #{tpu_custom_call.1} parent=1 // pred_region
      _
    $region9: #{tpu_custom_call.1} parent=1 // pred_fallthru
      _
    // Predicated region
    $region10: #{tpu_custom_call.1} parent=1 // pred_check
      _
    $region11: #{tpu_custom_call.1} parent=1 // pred_check_branch
      %18 = sbr.rel (0) target = $region13
    $region12: #{tpu_custom_call.1} parent=1 // pred_region
      _
    $region13: #{tpu_custom_call.1} parent=1 // pred_fallthru
      _
    // Predicated region
    $region14: #{tpu_custom_call.1} parent=1 // pred_check
      _
    $region15: #{tpu_custom_call.1} parent=1 // pred_check_branch
      %20 = sbr.rel (0) target = $region17
    $region16: #{tpu_custom_call.1} parent=1 // pred_region
      _
    $region17: #{tpu_custom_call.1} parent=1 // pred_fallthru
      _
    // Predicated region
    $region18: #{tpu_custom_call.1} parent=1 // pred_check
      _
    $region19: #{tpu_custom_call.1} parent=1 // pred_check_branch
      %22 = sbr.rel (0) target = $region21
    $region20: #{tpu_custom_call.1} parent=1 // pred_region
      _
    $region21: #{tpu_custom_call.1} parent=1 // pred_fallthru
      _
    // Predicated region
    $region22: #{tpu_custom_call.1} parent=1 // pred_check
      _
    $region23: #{tpu_custom_call.1} parent=1 // pred_check_branch
      %24 = sbr.rel (0) target = $region25
    $region24: #{tpu_custom_call.1} parent=1 // pred_region
      _
    $region25: #{tpu_custom_call.1} parent=1 // pred_fallthru
      _
    // Predicated region
    $region26: #{tpu_custom_call.1} parent=1 // pred_check
      _
    $region27: #{tpu_custom_call.1} parent=1 // pred_check_branch
      %26 = sbr.rel (0) target = $region29
    $region28: #{tpu_custom_call.1} parent=1 // pred_region
      _
    $region29: #{tpu_custom_call.1} parent=1 // pred_fallthru
      _
    %v27 = vld [vmem:[%s0] sm:$0x3]
    %v28 = vld [vmem:[%s1] sm:$0xff]
    %v29 = vld [vmem:[%s1 + $0x8] sm:$0xff]
    %v30 = vld [vmem:[%s2] sm:$0x1]
    %v32 = vperm.slane %v30, 0
    %vm34 = vcmask 130048
    %v36 = vsel %vm34, %v27, 0
    %38 = vmatpush.msra.mxu0 0.0
    %39 = vmatpush.msra.mxu0 0.0
    %40 = vmatpush.msra.mxu0 0.0
    %41 = vmatpush.msra.mxu0 0.0
    %42 = vmatpush.msra.mxu0 0.0
    %43 = vmatpush.msra.mxu0 0.0
    %44 = vmatpush.msra.mxu0 0.0
    %45 = vmatpush.msra.mxu0 0.0
    %46 = vmatpush.msra.mxu0 0.0
    %47 = vmatpush.msra.mxu0 0.0
    %48 = vmatpush.msra.mxu0 0.0
    %49 = vmatpush.msra.mxu0 0.0
    %50 = vmatpush.msra.mxu0 0.0
    %51 = vmatpush.msra.mxu0 0.0
    %52 = vmatpush.msra.mxu0 %v29
    %53 = vmatpush.msra.mxu0 %v28
    %54 = vmatmul.f32.gmra.mxu0 %v36
    %v55 = vpop.f32.mrf.mxu0
    %v56 = vadd.f32 %v32, %v55
    %57 = vdwg.mxu0
    %v58 = vmax.f32 %v56, 0.0
    %v59 = vld [vmem:[%s3] sm:$0xff]
    %v60 = vld [vmem:[%s3 + $0x8] sm:$0xff]
    %v61 = vld [vmem:[%s3 + $0x10] sm:$0xff]
    %v62 = vld [vmem:[%s3 + $0x18] sm:$0xff]
    %v63 = vld [vmem:[%s4] sm:$0x1]
    %v65 = vperm.slane %v63, 0
    %vm67 = vcmask 261120
    %v69 = vsel %vm67, %v58, 0
    %71 = vmatpush.msra.mxu0 0.0
    %72 = vmatpush.msra.mxu0 0.0
    %73 = vmatpush.msra.mxu0 0.0
    %74 = vmatpush.msra.mxu0 0.0
    %75 = vmatpush.msra.mxu0 0.0
    %76 = vmatpush.msra.mxu0 0.0
    %77 = vmatpush.msra.mxu0 0.0
    %78 = vmatpush.msra.mxu0 0.0
    %79 = vmatpush.msra.mxu0 0.0
    %80 = vmatpush.msra.mxu0 0.0
    %81 = vmatpush.msra.mxu0 0.0
    %82 = vmatpush.msra.mxu0 0.0
    %83 = vmatpush.msra.mxu0 %v62
    %84 = vmatpush.msra.mxu0 %v61
    %85 = vmatpush.msra.mxu0 %v60
    %86 = vmatpush.msra.mxu0 %v59
    %87 = vmatmul.f32.gmra.mxu0 %v69
    %v88 = vpop.f32.mrf.mxu0
    %v89 = vadd.f32 %v65, %v88
    %90 = vdwg.mxu0
    %v91 = vmax.f32 %v89, 0.0
    %v92 = vld [vmem:[%s5] sm:$0xff]
    %v93 = vld [vmem:[%s5 + $0x8] sm:$0xff]
    %v94 = vld [vmem:[%s5 + $0x10] sm:$0xff]
    %v95 = vld [vmem:[%s5 + $0x18] sm:$0xff]
    %v96 = vld [vmem:[%s5 + $0x20] sm:$0xff]
    %v97 = vld [vmem:[%s5 + $0x28] sm:$0xff]
    %v98 = vld [vmem:[%s5 + $0x30] sm:$0xff]
    %v99 = vld [vmem:[%s5 + $0x38] sm:$0xff]
    %v100 = vld [vmem:[%s6] sm:$0x1]
    %v102 = vperm.slane %v100, 0
    %vm104 = vcmask 523264
    %v106 = vsel %vm104, %v91, 0
    %108 = vmatpush.msra.mxu0 0.0
    %109 = vmatpush.msra.mxu0 0.0
    %110 = vmatpush.msra.mxu0 0.0
    %111 = vmatpush.msra.mxu0 0.0
    %112 = vmatpush.msra.mxu0 0.0
    %113 = vmatpush.msra.mxu0 0.0
    %114 = vmatpush.msra.mxu0 0.0
    %115 = vmatpush.msra.mxu0 0.0
    %116 = vmatpush.msra.mxu0 %v99
    %117 = vmatpush.msra.mxu0 %v98
    %118 = vmatpush.msra.mxu0 %v97
    %119 = vmatpush.msra.mxu0 %v96
    %120 = vmatpush.msra.mxu0 %v95
    %121 = vmatpush.msra.mxu0 %v94
    %122 = vmatpush.msra.mxu0 %v93
    %123 = vmatpush.msra.mxu0 %v92
    %124 = vmatmul.f32.gmra.mxu0 %v106
    %v125 = vpop.f32.mrf.mxu0
    %v126 = vadd.f32 %v102, %v125
    %127 = vdwg.mxu0
    %129 = vset.pattern.permute.xlu0 0
    %130 = vperm.xlu0 %129, %v126
    %v131 = vpop.permute.xlu0 %130
    %v133 = vadd.f32 %v131, %v126
    %134 = vrot.lane.b32.xlu0 %v126, 127
    %v135 = vpop.permute.xlu0 %134
    %vm137 = vcmask 25600
    %v138 = vsel %vm137, %v135, 0.0
    %139 = vadd.xlane.f32.xlu0 %v138
    %v140 = vpop.xlane.xlu0 %139
    %v141 = vrcp.pop 4.0
    %v142 = vmul.f32 4.0, %v141
    %v143 = vsub.f32 1.0, %v142
    %v144 = vmul.f32 %v141, %v143
    %v145 = vadd.f32 %v141, %v144
    %vm146 = vweird.f32 %v141
    %v147 = vsel %vm146, %v141, %v145
    %v148 = vmul.f32 %v140, %v147
    %v149 = vsub.f32 %v133, %v148
    %151 = vrot.lane.b32.xlu0 %v149, 127
    %v152 = vpop.permute.xlu0 %151
    %154 = vst.msk [vmem:[#allocation2] sm:$0x3] %vm137, %v152
    // Predicated region
    $region30: #{tpu_custom_call.1} parent=1 // pred_check
      _
    $region31: #{tpu_custom_call.1} parent=1 // pred_check_branch
      %156 = sbr.rel (0) target = $region33
    $region32: #{tpu_custom_call.1} parent=1 // pred_region
      %158 = vsyncadd [#allocation3], 0
      %s160 = sshll.u32 [#allocation2], 4
      %s161 = int_to_ptr.vmem [resolvable:$true] %s160
      %s162 = sshll.u32 %s7, 4
      %s163 = int_to_ptr.hbm [resolvable:$true] %s162
      %165 = dma.vmem_to_hbm [thread:$0]  %s161, 32, %s163, [#allocation3]
    $region33: #{tpu_custom_call.1} parent=1 // pred_fallthru
      _
    // Predicated region
    $region34: #{tpu_custom_call.1} parent=1 // pred_check
      _
    $region35: #{tpu_custom_call.1} parent=1 // pred_check_branch
      %167 = sbr.rel (0) target = $region37
    $region36: #{tpu_custom_call.1} parent=1 // pred_region
      %169 = dma.done [#allocation3], 32
    $region37: #{tpu_custom_call.1} parent=1 // pred_fallthru
      _
    %170 = vsyncpa [#allocation3], 1

</llo_original>
